<compile_context>
chip_gen: v5e
topology: v5e:2x2
jax: 0.10.0
libtpu: 0.0.40
codegen_flags: <defaults>
</compile_context>

<pallas_src>
import jax
import jax.numpy as jnp
from jax.experimental import pallas as pl
from jax.experimental.pallas import tpu as pltpu

_MAX_DMA_CHUNKS = 4          # max concurrent DMAs for very long sequences
_MIN_ROWS_PER_CHUNK = 1024   # don't bother splitting below this many rows


def _make_copy_kernel(chunk_bounds):
    """Kernel: HBM->HBM copy of table rows [0, length) into the output."""

    def kernel(table_ref, out_ref, sems):
        # Start all chunk copies (concurrent DMAs), then wait on all of them.
        copies = []
        for c, (start, size) in enumerate(chunk_bounds):
            cp = pltpu.make_async_copy(
                table_ref.at[pl.ds(start, size), :],
                out_ref.at[pl.ds(start, size), :],
                sems.at[c],
            )
            cp.start()
            copies.append(cp)
        for cp in copies:
            cp.wait()

    return kernel


def absolute_positional_embedding(emb_table: jax.Array, x: jax.Array) -> jax.Array:
    """Returns embedding(arange(x.shape[1])) of shape [length, features]."""
    max_length, features = emb_table.shape
    length = x.shape[1]
    assert length <= max_length, "Input sequence length must be <= max_length"

    # Static, even chunking of the row range [0, length).
    num_chunks = max(1, min(_MAX_DMA_CHUNKS, length // _MIN_ROWS_PER_CHUNK))
    base, rem = divmod(length, num_chunks)
    chunk_bounds = []
    start = 0
    for c in range(num_chunks):
        size = base + (1 if c < rem else 0)
        chunk_bounds.append((start, size))
        start += size

    return pl.pallas_call(
        _make_copy_kernel(tuple(chunk_bounds)),
        out_shape=jax.ShapeDtypeStruct((length, features), emb_table.dtype),
        in_specs=[pl.BlockSpec(memory_space=pl.ANY)],   # raw HBM ref, no auto-DMA
        out_specs=pl.BlockSpec(memory_space=pl.ANY),    # write output directly in HBM
        scratch_shapes=[pltpu.SemaphoreType.DMA((num_chunks,))],
    )(emb_table)


if __name__ == "__main__":
    features = 32
    max_length = 64
    batch, length = 2, 8

    key = jax.random.PRNGKey(0)
    k_emb, k_x = jax.random.split(key)

    # Deterministic "nn.Embedding(max_length, features)" weight (N(0,1) init).
    emb_table = jax.random.normal(k_emb, (max_length, features), dtype=jnp.float32)
    # Input x: only its sequence length matters to the forward pass.
    x = jax.random.normal(k_x, (batch, length, features), dtype=jnp.float32)

    out = absolute_positional_embedding(emb_table, x)
    out = jax.block_until_ready(out)
    assert out.shape == (length, features)
    assert jnp.allclose(out, emb_table[:length]), "mismatch vs reference embedding lookup"

    # Non-multiple-of-8 sequence length also works (DMA path has no (8,128)
    # block-shape constraint and no `length % 8 == 0` assumption).
    length_odd = 5
    x_odd = jnp.zeros((batch, length_odd, features), dtype=jnp.float32)
    out_odd = jax.block_until_ready(absolute_positional_embedding(emb_table, x_odd))
    assert out_odd.shape == (length_odd, features)
    assert jnp.allclose(out_odd, emb_table[:length_odd]), "mismatch (odd length)"

    print("KERNEL_OK")
</pallas_src>

<mosaic_0001>
module attributes {stable_mosaic.version = 11 : i64} {
  func.func @kernel(%arg0: memref<64x32xf32, #tpu.memory_space<any>>, %arg1: memref<8x32xf32, #tpu.memory_space<any>>, %arg2: memref<1x!tpu.dma_semaphore, #tpu.memory_space<semaphore_mem>>) attributes {dimension_semantics = [], scalar_prefetch = 0 : i64, scratch_operands = 1 : i64, tpu.core_type = #tpu.core_type<tc>} {
    %c0_i32 = arith.constant 0 : i32
    %c0_i32_0 = arith.constant 0 : i32
    %c0_i32_1 = arith.constant 0 : i32
    %0 = tpu.memref_slice %arg0[%c0_i32_0, %c0_i32_1] : memref<64x32xf32, #tpu.memory_space<any>> -> memref<8x32xf32, #tpu.memory_space<any>>
    %c0_i32_2 = arith.constant 0 : i32
    %c0_i32_3 = arith.constant 0 : i32
    %1 = tpu.memref_slice %arg1[%c0_i32_2, %c0_i32_3] : memref<8x32xf32, #tpu.memory_space<any>> -> memref<8x32xf32, #tpu.memory_space<any>>
    %2 = tpu.memref_slice %arg2[%c0_i32] : memref<1x!tpu.dma_semaphore, #tpu.memory_space<semaphore_mem>> -> memref<1x!tpu.dma_semaphore, #tpu.memory_space<semaphore_mem>>
    %3 = tpu.memref_squeeze %2 : memref<1x!tpu.dma_semaphore, #tpu.memory_space<semaphore_mem>> -> memref<!tpu.dma_semaphore, #tpu.memory_space<semaphore_mem>>
    tpu.enqueue_dma source(%0 : memref<8x32xf32, #tpu.memory_space<any>>) target(%1 : memref<8x32xf32, #tpu.memory_space<any>>) target_semaphore(%3 : memref<!tpu.dma_semaphore, #tpu.memory_space<semaphore_mem>>)
    %c0_i32_4 = arith.constant 0 : i32
    %c0_i32_5 = arith.constant 0 : i32
    %c0_i32_6 = arith.constant 0 : i32
    %4 = tpu.memref_slice %arg0[%c0_i32_5, %c0_i32_6] : memref<64x32xf32, #tpu.memory_space<any>> -> memref<8x32xf32, #tpu.memory_space<any>>
    %c0_i32_7 = arith.constant 0 : i32
    %c0_i32_8 = arith.constant 0 : i32
    %5 = tpu.memref_slice %arg1[%c0_i32_7, %c0_i32_8] : memref<8x32xf32, #tpu.memory_space<any>> -> memref<8x32xf32, #tpu.memory_space<any>>
    %6 = tpu.memref_slice %arg2[%c0_i32_4] : memref<1x!tpu.dma_semaphore, #tpu.memory_space<semaphore_mem>> -> memref<1x!tpu.dma_semaphore, #tpu.memory_space<semaphore_mem>>
    %7 = tpu.memref_squeeze %6 : memref<1x!tpu.dma_semaphore, #tpu.memory_space<semaphore_mem>> -> memref<!tpu.dma_semaphore, #tpu.memory_space<semaphore_mem>>
    tpu.wait_dma2 semaphore(%7 : memref<!tpu.dma_semaphore, #tpu.memory_space<semaphore_mem>>) src(%4 : memref<8x32xf32, #tpu.memory_space<any>>) dst(%5 : memref<8x32xf32, #tpu.memory_space<any>>)
    return
  }
}

</mosaic_0001>

<llo_original>
// kernel: tpu_custom_call.1
$region0: #{tpu_custom_call.1}
  #allocation0 [shape = 'u32[]', space=smem, size = 0x4, offset = 0x4, fixed_abs, tag = 'smem constant byte address 0x4 - core index']
  #allocation1 [shape = 'u32[72,128]{1,0:T(1,128)}', space=vmem, size = 0x9000, scoped, tag = 'internal scratch']
  #allocation2 [shape = 's32[1]{0}', space=sflag, size = 0x4, scoped, tag = 'scratch operand']
  #allocation3 [shape = 's32[]', space=sflag, size = 0x4, offset = 0, fixed_abs, tag = 'sflag constant byte address 0x0 - dummy sync flag']
  #allocation4 [shape = 's32[]', space=sflag, size = 0x4, offset = 0, fixed_abs, tag = 'sflag constant byte address 0x0 - dummy sync flag']
  #allocation5 [shape = 'u32[]', space=smem, size = 0x4, offset = 0x44, fixed_abs, tag = 'smem constant byte address 0x44 - assertion arg 0']
  #allocation6 [shape = 'u32[]', space=smem, size = 0x4, offset = 0x48, fixed_abs, tag = 'smem constant byte address 0x48 - assertion arg 1']
  %s0 = inlined_call_operand.vmem [shape: f32[64,32], index: 0, kind: input, shape index: {}]
  %s1 = inlined_call_operand.hbm [shape: f32[8,32], index: 1, kind: output, shape index: {}]
  %s2 = sld [smem:[#allocation0]]
  $region6: #{tpu_custom_call.1} parent=0
    _
  %s4 = ssub.s32 1, %s2
  %s5 = scalar_select 0, %s4, %s2
  // Predicated region
  $region2: #{tpu_custom_call.1} parent=0 // pred_check
    _
  $region3: #{tpu_custom_call.1} parent=0 // pred_check_branch
    %7 = sbr.rel target = $region5
  $region4: #{tpu_custom_call.1} parent=0 // pred_region
    %8 = sst [smem:[#allocation5]] [#allocation4]
    %9 = sst [smem:[#allocation6]] [#allocation3]
  $region5: #{tpu_custom_call.1} parent=0 // pred_fallthru
    _
  %11 = shalt.err (0)
  %s13 = sshll.u32 %s0, 4
  %s14 = int_to_ptr.vmem [resolvable:$true] %s13
  %s15 = sshll.u32 %s1, 4
  %s16 = int_to_ptr.hbm [resolvable:$true] %s15
  %18 = dma.vmem_to_hbm [thread:$0]  %s14, 128, %s16, [#allocation2]
  %s19 = smul.u32 8, 1
  %s20 = sshll.u32 %s19, 4
  %21 = dma.done [#allocation2], %s20
  %22 = vsyncmov [#allocation2]
  %s23 = vpop.sfrf %22
  %p24 = scmp.eq.s32.totalorder %s23, 0
  %p25 = pneg %p24
  %27 = shalt.err (%p25)

</llo_original>
